<compile_context>
chip_gen: v7x
topology: tpu7x:2x2x1
jax: 0.10.0
libtpu: 0.0.40
codegen_flags: <defaults>
</compile_context>

<pallas_src>
import jax
import jax.numpy as jnp
from jax import lax
from jax.experimental import pallas as pl
from jax.experimental.pallas import tpu as pltpu


# Auto-chunk the HBM->HBM copy into this many descriptors once an item exceeds
# the byte threshold (per-descriptor latency hiding; ~10-20% on large copies).
_CHUNK_BYTES_THRESHOLD = 4 << 20   # 4 MiB
_DEFAULT_NUM_CHUNKS = 4


def _item_chunk_bounds(item_shape, itemsize, num_chunks=None):
    """Static (start, size) row-chunks along the leading item axis, or None for
    a single whole-slab copy.  Only chunks when the item is >= 2-D so the lane
    (last) dim is never split."""
    nelems = 1
    for d in item_shape:
        nelems *= d
    if num_chunks is None:
        num_chunks = (
            _DEFAULT_NUM_CHUNKS
            if nelems * itemsize >= _CHUNK_BYTES_THRESHOLD
            else 1
        )
    if num_chunks <= 1 or len(item_shape) < 2 or item_shape[0] < num_chunks:
        return None
    rows = item_shape[0]
    base, rem = divmod(rows, num_chunks)
    bounds, start = [], 0
    for c in range(num_chunks):
        size = base + (1 if c < rem else 0)
        bounds.append((start, size))
        start += size
    return bounds


def _start_chunk_copies(idx, x_hbm, o_hbm, sems, chunk_bounds):
    """Issue all DMA descriptors for the selected slab, then return them."""
    copies = []
    if chunk_bounds is None:
        cp = pltpu.make_async_copy(x_hbm.at[idx], o_hbm, sems.at[0])
        cp.start()
        copies.append(cp)
    else:
        for c, (start, size) in enumerate(chunk_bounds):
            cp = pltpu.make_async_copy(
                x_hbm.at[idx, pl.ds(start, size)],
                o_hbm.at[pl.ds(start, size)],
                sems.at[c],
            )
            cp.start()
            copies.append(cp)
    return copies


def _make_static_select_kernel(idx_static, chunk_bounds):
    """Index known at trace time: no scalar prefetch, DMA starts immediately."""

    def kernel(x_hbm, o_hbm, sems):
        copies = _start_chunk_copies(idx_static, x_hbm, o_hbm, sems, chunk_bounds)
        for cp in copies:
            cp.wait()

    return kernel


def _make_dynamic_select_kernel(num_items, chunk_bounds):
    """Runtime index via scalar prefetch (SMEM); one compile serves all indices.
    Negative indices wrap (PyTorch semantics) and the index is clamped so an
    out-of-range value can never produce an OOB DMA."""

    def kernel(idx_ref, x_hbm, o_hbm, sems):
        idx = idx_ref[0]
        idx = jnp.where(idx < 0, idx + num_items, idx)
        idx = jnp.clip(idx, 0, num_items - 1)
        copies = _start_chunk_copies(idx, x_hbm, o_hbm, sems, chunk_bounds)
        for cp in copies:
            cp.wait()

    return kernel


def select_item_materialized(stacked, item_index, *, num_chunks=None):
    """stacked: (num_items, *item_shape).  Returns stacked[item_index] as a
    freshly materialized HBM buffer via direct HBM->HBM DMA (no VMEM staging).
    item_index may be a Python int (baked into the kernel) or a traced int
    scalar (scalar prefetch; one compiled kernel serves every index)."""
    num_items = stacked.shape[0]
    item_shape = stacked.shape[1:]
    chunk_bounds = _item_chunk_bounds(item_shape, stacked.dtype.itemsize, num_chunks)
    n_sems = 1 if chunk_bounds is None else len(chunk_bounds)

    out_shape = jax.ShapeDtypeStruct(item_shape, stacked.dtype)
    compiler_params = pltpu.CompilerParams(
        dimension_semantics=("arbitrary",),
        has_side_effects=True,  # output is produced via manual DMA
    )

    if isinstance(item_index, int) and not isinstance(item_index, bool):
        # Static index: normalize / bounds-check in Python (PyTorch IndexError
        # semantics), bake into the kernel — no host->device scalar transfer
        # and no SMEM-prefetch dependency before the DMA can start.
        idx = item_index + num_items if item_index < 0 else item_index
        if not (0 <= idx < num_items):
            raise IndexError(
                f"item_index {item_index} out of range for {num_items} items"
            )
        return pl.pallas_call(
            _make_static_select_kernel(idx, chunk_bounds),
            out_shape=out_shape,
            grid_spec=pltpu.PrefetchScalarGridSpec(
                num_scalar_prefetch=0,
                grid=(1,),
                in_specs=[pl.BlockSpec(memory_space=pl.ANY)],   # stay in HBM
                out_specs=pl.BlockSpec(memory_space=pl.ANY),    # written by DMA
                scratch_shapes=[pltpu.SemaphoreType.DMA((n_sems,))],
            ),
            compiler_params=compiler_params,
        )(stacked)

    # Traced / runtime index: deliver it via scalar prefetch (SMEM).
    idx_arr = jnp.asarray(item_index, dtype=jnp.int32).reshape((1,))
    return pl.pallas_call(
        _make_dynamic_select_kernel(num_items, chunk_bounds),
        out_shape=out_shape,
        grid_spec=pltpu.PrefetchScalarGridSpec(
            num_scalar_prefetch=1,
            grid=(1,),
            in_specs=[pl.BlockSpec(memory_space=pl.ANY)],
            out_specs=pl.BlockSpec(memory_space=pl.ANY),
            scratch_shapes=[pltpu.SemaphoreType.DMA((n_sems,))],
        ),
        compiler_params=compiler_params,
    )(idx_arr, stacked)


class SelectItem:
    """Mirror of the PyTorch module; forward(inputs) == inputs[item_index].

    materialize=False (default): array inputs go through lax.index_in_dim /
    lax.dynamic_index_in_dim so XLA can fuse the slice into the consumer —
    no copy, no kernel launch.  materialize=True: force a standalone HBM
    buffer via the Pallas HBM->HBM DMA kernel."""

    def __init__(self, item_index, materialize=False):
        self.item_index = item_index
        self.materialize = materialize

    def __call__(self, inputs):
        if isinstance(inputs, (tuple, list)):
            # Exact PyTorch semantics: pure Python indexing of the sequence.
            return inputs[self.item_index]
        if self.materialize:
            return select_item_materialized(inputs, self.item_index)
        if isinstance(self.item_index, int) and not isinstance(self.item_index, bool):
            return lax.index_in_dim(inputs, self.item_index, axis=0, keepdims=False)
        return lax.dynamic_index_in_dim(inputs, self.item_index, axis=0, keepdims=False)


if __name__ == "__main__":
    key = jax.random.PRNGKey(0)
    # Small LSTM-ish shapes: 3 candidate tensors, each (seq=8, batch=2, hidden=128).
    num_items, S, B, H = 3, 8, 2, 128
    keys = jax.random.split(key, num_items)
    inputs = tuple(jax.random.normal(k, (S, B, H), dtype=jnp.float32) for k in keys)

    item_index = 1
    module = SelectItem(item_index)

    # Path 1: tuple input -> pure Python index (PyTorch semantics, zero copy).
    out_tuple = module(inputs)
    assert out_tuple is inputs[item_index]

    stacked = jnp.stack(inputs, axis=0)  # built here only to exercise the array paths

    # Path 2 (default array path): XLA-fusable slice, no Pallas, no extra copy.
    out_fused = jax.block_until_ready(module(stacked))
    assert out_fused.shape == inputs[item_index].shape
    assert bool(jnp.array_equal(out_fused, inputs[item_index]))

    # Path 3: Pallas materialized select — static index baked into the kernel,
    # single direct HBM->HBM DMA, zero VMEM.
    out_static = jax.block_until_ready(select_item_materialized(stacked, item_index))
    assert out_static.shape == inputs[item_index].shape
    assert out_static.dtype == inputs[item_index].dtype
    assert bool(jnp.array_equal(out_static, inputs[item_index])), "static select mismatch"

    # Negative static index (PyTorch semantics) on the kernel path.
    out_neg = jax.block_until_ready(select_item_materialized(stacked, -1))
    assert bool(jnp.array_equal(out_neg, inputs[-1])), "negative-index select mismatch"

    # Runtime (traced) index via scalar prefetch: one compiled kernel serves
    # every index, with negative wrap + clamp hardening inside the kernel.
    dyn_select = jax.jit(lambda x, i: select_item_materialized(x, i))
    for idx in (0, 2, -2):
        got = jax.block_until_ready(dyn_select(stacked, jnp.int32(idx)))
        assert bool(jnp.array_equal(got, inputs[idx])), f"dynamic select mismatch @ {idx}"

    # Multi-descriptor chunked copy path (forced at small scale for coverage;
    # auto-enabled only for multi-MiB items in real use).
    out_chunked = jax.block_until_ready(
        select_item_materialized(stacked, item_index, num_chunks=4)
    )
    assert bool(jnp.array_equal(out_chunked, inputs[item_index])), "chunked select mismatch"

    print("KERNEL_OK")
</pallas_src>

<mosaic_0001>
module attributes {stable_mosaic.version = 11 : i64} {
  func.func @kernel(%arg0: i32, %arg1: memref<3x8x2x128xf32, #tpu.memory_space<any>>, %arg2: memref<8x2x128xf32, #tpu.memory_space<any>>, %arg3: memref<1x!tpu.dma_semaphore, #tpu.memory_space<semaphore_mem>>) attributes {dimension_semantics = [#tpu.dimension_semantics<arbitrary>], iteration_bounds = array<i64: 1>, scalar_prefetch = 0 : i64, scratch_operands = 1 : i64, tpu.core_type = #tpu.core_type<tc>, window_params = [{}, {}]} {
    %c1_i32 = arith.constant 1 : i32
    %c0_i32 = arith.constant 0 : i32
    %c0_i32_0 = arith.constant 0 : i32
    %c0_i32_1 = arith.constant 0 : i32
    %c0_i32_2 = arith.constant 0 : i32
    %0 = tpu.memref_slice %arg1[%c1_i32, %c0_i32_0, %c0_i32_1, %c0_i32_2] : memref<3x8x2x128xf32, #tpu.memory_space<any>> -> memref<1x8x2x128xf32, #tpu.memory_space<any>>
    %1 = tpu.memref_squeeze %0 : memref<1x8x2x128xf32, #tpu.memory_space<any>> -> memref<8x2x128xf32, #tpu.memory_space<any>>
    %2 = tpu.memref_slice %arg3[%c0_i32] : memref<1x!tpu.dma_semaphore, #tpu.memory_space<semaphore_mem>> -> memref<1x!tpu.dma_semaphore, #tpu.memory_space<semaphore_mem>>
    %3 = tpu.memref_squeeze %2 : memref<1x!tpu.dma_semaphore, #tpu.memory_space<semaphore_mem>> -> memref<!tpu.dma_semaphore, #tpu.memory_space<semaphore_mem>>
    tpu.enqueue_dma source(%1 : memref<8x2x128xf32, #tpu.memory_space<any>>) target(%arg2 : memref<8x2x128xf32, #tpu.memory_space<any>>) target_semaphore(%3 : memref<!tpu.dma_semaphore, #tpu.memory_space<semaphore_mem>>)
    %c1_i32_3 = arith.constant 1 : i32
    %c0_i32_4 = arith.constant 0 : i32
    %c0_i32_5 = arith.constant 0 : i32
    %c0_i32_6 = arith.constant 0 : i32
    %c0_i32_7 = arith.constant 0 : i32
    %4 = tpu.memref_slice %arg1[%c1_i32_3, %c0_i32_5, %c0_i32_6, %c0_i32_7] : memref<3x8x2x128xf32, #tpu.memory_space<any>> -> memref<1x8x2x128xf32, #tpu.memory_space<any>>
    %5 = tpu.memref_squeeze %4 : memref<1x8x2x128xf32, #tpu.memory_space<any>> -> memref<8x2x128xf32, #tpu.memory_space<any>>
    %6 = tpu.memref_slice %arg3[%c0_i32_4] : memref<1x!tpu.dma_semaphore, #tpu.memory_space<semaphore_mem>> -> memref<1x!tpu.dma_semaphore, #tpu.memory_space<semaphore_mem>>
    %7 = tpu.memref_squeeze %6 : memref<1x!tpu.dma_semaphore, #tpu.memory_space<semaphore_mem>> -> memref<!tpu.dma_semaphore, #tpu.memory_space<semaphore_mem>>
    tpu.wait_dma2 semaphore(%7 : memref<!tpu.dma_semaphore, #tpu.memory_space<semaphore_mem>>) src(%5 : memref<8x2x128xf32, #tpu.memory_space<any>>) dst(%arg2 : memref<8x2x128xf32, #tpu.memory_space<any>>)
    return
  }
}

</mosaic_0001>

<llo_original>
// kernel: tpu_custom_call.1
$region0: #{tpu_custom_call.1}
  #allocation0 [shape = 'u32[]', space=smem, size = 0x4, offset = 0x4, fixed_abs, tag = 'smem constant byte address 0x4 - core index']
  #allocation1 [shape = 'u32[144,128]{1,0:T(1,128)}', space=vmem, size = 0x12000, scoped, tag = 'internal scratch']
  #allocation2 [shape = 's32[1]{0}', space=sflag, size = 0x4, scoped, tag = 'scratch operand']
  #allocation3 [shape = 's32[]', space=sflag, size = 0x4, offset = 0, fixed_abs, tag = 'sflag constant byte address 0x0 - dummy sync flag']
  #allocation4 [shape = 'u32[0]{0}', space=smem, size = 0, offset = 0, fixed_abs, tag = 'smem constant byte address 0x0 - null']
  %s0 = inlined_call_operand.hbm [shape: f32[3,8,2,128], index: 0, kind: input, shape index: {}]
  %s1 = inlined_call_operand.hbm [shape: f32[8,2,128], index: 1, kind: output, shape index: {}]
  %s2 = sld [smem:[#allocation0]]
  $region2: #{tpu_custom_call.1} parent=0
    _
  %s4 = ssub.s32 1, %s2
  %s5 = scalar_select 0, %s4, %s2
  %s6 = scalar_lea.hbm %s0, 256
  %s8 = sshll.u32 1, 14
  %s9 = sxor.u32 4294967295, %s8
  %s12 = sshll.u32 3, 24
  %s13 = sxor.u32 4294967295, %s12
  %s14 = sand.u32 0, %s13
  %s16 = sor.u32 %s14, 0
  %19 = dma.general %s6, 256, %s1, [#allocation2], [#allocation3], [#allocation4], %s16, 0
  %s20 = smul.u32 8, 2
  %s21 = smul.u32 %s20, 1
  %s22 = sshll.u32 %s21, 4
  %23 = dma.done [#allocation2], %s22
  %24 = vsyncmov [#allocation2]
  %s25 = vpop.sfrf %24
  %p26 = scmp.eq.s32.totalorder %s25, 0
  %p27 = pneg %p26
  %29 = shalt.err (%p27)

</llo_original>
